<compile_context>
chip_gen: v7x
topology: tpu7x:2x2x1
jax: 0.10.0
libtpu: 0.0.40
codegen_flags: <defaults>
</compile_context>

<pallas_src>
import functools

import jax
import jax.numpy as jnp
from jax import lax
from jax.experimental import pallas as pl
from jax.experimental.pallas import tpu as pltpu


def _attention_kernel(feat_ref, wf_ref, sp_ref, wp_ref, out_ref, cols_ref, *, H, W, C, Bb):
    Wpad = W + 2
    HWp = H * Wpad                       # spatial extent on the padded-width layout

    # Resident weights (constant block index -> fetched once across the grid).
    wf = wf_ref[...]                     # (A, 9C) bf16
    wp = wp_ref[...]                     # (1, A)  bf16

    # Softmax mask for the 2 padded columns of each row, generated in-kernel.
    lane = lax.broadcasted_iota(jnp.int32, (1, HWp), 1)
    pad_bias = jnp.where(lane % Wpad < W, 0.0, -1e30).astype(jnp.float32)

    def batch_body(bi, carry):
        xb = feat_ref[bi]                # (C, L) bf16 padded-feature tile

        # Stage the 9 shifted conv-tap views once into a contiguous (9C, HWp) im2col tile.
        for t in range(9):
            off = (t // 3) * Wpad + (t % 3)
            cols_ref[t * C:(t + 1) * C, :] = xb[:, off:off + HWp]

        # 3x3 conv (padding=1) as ONE MXU matmul with K = 9C, f32 accumulation.
        acc = jnp.dot(wf, cols_ref[...], preferred_element_type=jnp.float32)   # (A, HWp)

        # + state projection (1x1 conv) and feat_conv bias (both folded into sp); tanh f32.
        proj = jnp.tanh(acc + sp_ref[bi])                                      # (A, HWp)

        # attention_projector: 1x1 conv, no bias.
        att = jnp.dot(wp, proj.astype(wp.dtype),
                      preferred_element_type=jnp.float32)                      # (1, HWp)

        # softmax over valid spatial positions (padded columns -> -1e30 -> weight 0).
        att = att + pad_bias
        att = att - jnp.max(att, axis=1, keepdims=True)
        e = jnp.exp(att)
        att = e * pl.reciprocal(jnp.sum(e, axis=1, keepdims=True), approx=True)

        # glimpse = attention-weighted spatial sum, as an MXU contraction over HWp.
        # Center-tap rows of the staged im2col are exactly the original (padded==0) features.
        feat_c = cols_ref[4 * C:5 * C, :]                                      # (C, HWp) bf16
        glimpse = lax.dot_general(att.astype(feat_c.dtype), feat_c,
                                  (((1,), (1,)), ((), ())),
                                  preferred_element_type=jnp.float32)          # (1, C)
        out_ref[0, pl.ds(bi, 1), :] = glimpse.astype(out_ref.dtype)
        return carry

    lax.fori_loop(0, Bb, batch_body, 0)


def _pick_block_batch(B, C, L):
    # Prefer >= 2 grid steps (v7x megacore) while keeping the double-buffered feature
    # block modest (v7x has only 64 MiB VMEM / 32 MiB scoped default).
    budget = 8 * 1024 * 1024
    for bb in (4, 2, 1):
        if B % bb == 0 and B // bb >= 2 and 2 * bb * C * L * 2 <= budget:
            return bb
    return 1


def attention_module(features, hidden_state, Wf, bf, Ws, Wp):
    """features: (B, C, H, W) NCHW; hidden_state: (B, S, 1, 1).
    Wf: (A, C, 3, 3), bf: (A,), Ws: (A, S, 1, 1), Wp: (1, A, 1, 1). Returns (B, C)."""
    B, C, H, W = features.shape
    A = Wf.shape[0]
    S = Ws.shape[1]
    Hpad, Wpad = H + 2, W + 2
    HWp = H * Wpad
    # Tap slices reach up to offset 2*Wpad + 2 + HWp = Hpad*Wpad + 2; round up to lanes.
    L = ((Hpad * Wpad + 2 + 127) // 128) * 128
    Bb = _pick_block_batch(B, C, L)
    G = B // Bb

    # --- wrapper glue (tiny next to the single feature pass) ---
    # Pad + flatten features once; XLA fuses the two pads into a single HBM pass.
    feat = jnp.pad(features, ((0, 0), (0, 0), (1, 1), (1, 1))).reshape(B, C, Hpad * Wpad)
    feat = jnp.pad(feat, ((0, 0), (0, 0), (0, L - Hpad * Wpad))).astype(jnp.bfloat16)

    # Conv weights flattened to (A, 9C); row order (kh, kw, c) matches the in-kernel im2col.
    wf_flat = jnp.transpose(Wf, (0, 2, 3, 1)).reshape(A, 9 * C).astype(jnp.bfloat16)
    # state_conv (1x1, no bias) + feat_conv bias, precomputed once in f32.
    sp = (hidden_state.reshape(B, S).astype(jnp.float32)
          @ Ws[:, :, 0, 0].T.astype(jnp.float32)
          + bf.astype(jnp.float32)[None, :]).reshape(B, A, 1)
    wp_row = Wp[:, :, 0, 0].astype(jnp.bfloat16)                    # (1, A)

    kernel = functools.partial(_attention_kernel, H=H, W=W, C=C, Bb=Bb)
    out = pl.pallas_call(
        kernel,
        out_shape=jax.ShapeDtypeStruct((G, Bb, C), features.dtype),
        grid_spec=pltpu.PrefetchScalarGridSpec(
            num_scalar_prefetch=0,
            grid=(G,),
            in_specs=[
                pl.BlockSpec((Bb, C, L), lambda b: (b, 0, 0)),      # padded features (per block)
                pl.BlockSpec((A, 9 * C), lambda b: (0, 0)),         # conv tap weights (resident)
                pl.BlockSpec((Bb, A, 1), lambda b: (b, 0, 0)),      # state proj + conv bias
                pl.BlockSpec((1, A), lambda b: (0, 0)),             # projector weight (resident)
            ],
            out_specs=pl.BlockSpec((1, Bb, C), lambda b: (b, 0, 0)),
            scratch_shapes=[pltpu.VMEM((9 * C, HWp), jnp.bfloat16)],  # im2col staging tile
        ),
        compiler_params=pltpu.CompilerParams(
            dimension_semantics=("parallel",),
            vmem_limit_bytes=32 * 1024 * 1024,
        ),
    )(feat, wf_flat, sp, wp_row)
    return out.reshape(B, C)


def _reference(features, hidden_state, Wf, bf, Ws, Wp):
    B = features.shape[0]
    feat_proj = lax.conv_general_dilated(
        features, Wf, window_strides=(1, 1), padding='SAME',
        dimension_numbers=('NCHW', 'OIHW', 'NCHW')) + bf[None, :, None, None]
    state_proj = jnp.einsum('bs,as->ba', hidden_state.reshape(B, -1), Ws[:, :, 0, 0])
    proj = jnp.tanh(feat_proj + state_proj[:, :, None, None])
    att = jnp.einsum('bahw,a->bhw', proj, Wp[0, :, 0, 0])
    att = jax.nn.softmax(att.reshape(B, -1), axis=1).reshape(
        B, 1, features.shape[-2], features.shape[-1])
    return (features * att).sum(axis=(2, 3))


if __name__ == "__main__":
    B, C, S, A, H, W = 2, 4, 8, 32, 16, 16  # feat_chans=C, state_chans=S, attention_units=A

    key = jax.random.PRNGKey(0)
    k = jax.random.split(key, 6)
    features = jax.random.normal(k[0], (B, C, H, W), jnp.float32)
    hidden_state = jax.random.normal(k[1], (B, S, 1, 1), jnp.float32)
    Wf = 0.2 * jax.random.normal(k[2], (A, C, 3, 3), jnp.float32)
    bf = 0.1 * jax.random.normal(k[3], (A,), jnp.float32)
    Ws = 0.2 * jax.random.normal(k[4], (A, S, 1, 1), jnp.float32)
    Wp = 0.2 * jax.random.normal(k[5], (1, A, 1, 1), jnp.float32)

    out = attention_module(features, hidden_state, Wf, bf, Ws, Wp)
    jax.block_until_ready(out)

    ref = _reference(features, hidden_state, Wf, bf, Ws, Wp)
    assert out.shape == (B, C)
    # bf16 inputs / bf16 MXU operands with f32 accumulation -> loosened tolerance.
    assert jnp.allclose(out, ref, atol=3e-2, rtol=3e-2), float(jnp.max(jnp.abs(out - ref)))
    print("KERNEL_OK")
</pallas_src>

<mosaic_0001>
module attributes {stable_mosaic.version = 11 : i64} {
  func.func @_attention_kernel(%arg0: i32, %arg1: memref<1x4x384xbf16, #tpu.memory_space<vmem>>, %arg2: memref<32x36xbf16, #tpu.memory_space<vmem>>, %arg3: memref<1x32x1xf32, #tpu.memory_space<vmem>>, %arg4: memref<1x32xbf16, #tpu.memory_space<vmem>>, %arg5: memref<1x1x4xf32, #tpu.memory_space<vmem>>, %arg6: memref<36x288xbf16, #tpu.memory_space<vmem>>) attributes {dimension_semantics = [#tpu.dimension_semantics<parallel>], iteration_bounds = array<i64: 2>, scalar_prefetch = 0 : i64, scratch_operands = 1 : i64, tpu.core_type = #tpu.core_type<tc>, window_params = [{transform_indices = @transform_0, window_bounds = array<i64: 1, 4, 384>}, {pipeline_mode = #tpu.pipeline_mode<synchronous>, transform_indices = @transform_1, window_bounds = array<i64: 32, 36>}, {transform_indices = @transform_2, window_bounds = array<i64: 1, 32, 1>}, {pipeline_mode = #tpu.pipeline_mode<synchronous>, transform_indices = @transform_3, window_bounds = array<i64: 1, 32>}, {transform_indices = @transform_4, window_bounds = array<i64: 1, 1, 4>}]} {
    %c0 = arith.constant 0 : index
    %c0_0 = arith.constant 0 : index
    %0 = vector.load %arg2[%c0, %c0_0] : memref<32x36xbf16, #tpu.memory_space<vmem>>, vector<32x36xbf16>
    %c0_1 = arith.constant 0 : index
    %c0_2 = arith.constant 0 : index
    %1 = vector.load %arg4[%c0_1, %c0_2] : memref<1x32xbf16, #tpu.memory_space<vmem>>, vector<1x32xbf16>
    %2 = tpu.iota {dimensions = array<i32: 1>} : vector<1x288xi32>
    %c18_i32 = arith.constant 18 : i32
    %c0_i32 = arith.constant 0 : i32
    %3 = arith.cmpi eq, %c18_i32, %c0_i32 : i32
    %c1_i32 = arith.constant 1 : i32
    %4 = arith.select %3, %c1_i32, %c18_i32 : i32
    %5 = vector.broadcast %4 : i32 to vector<1x288xi32>
    %6 = arith.remsi %2, %5 : vector<1x288xi32>
    %c0_i32_3 = arith.constant 0 : i32
    %7 = vector.broadcast %c0_i32_3 : i32 to vector<1x288xi32>
    %8 = arith.cmpi ne, %6, %7 : vector<1x288xi32>
    %c0_i32_4 = arith.constant 0 : i32
    %9 = vector.broadcast %c0_i32_4 : i32 to vector<1x288xi32>
    %10 = arith.cmpi slt, %6, %9 : vector<1x288xi32>
    %c0_i32_5 = arith.constant 0 : i32
    %11 = arith.cmpi slt, %4, %c0_i32_5 : i32
    %12 = vector.broadcast %11 : i1 to vector<1x288xi1>
    %13 = vector.broadcast %12 : vector<1x288xi1> to vector<1x288xi1>
    %14 = arith.xori %10, %13 : vector<1x288xi1>
    %15 = arith.andi %14, %8 : vector<1x288xi1>
    %16 = vector.broadcast %4 : i32 to vector<1x288xi32>
    %17 = arith.addi %6, %16 : vector<1x288xi32>
    %18 = arith.select %15, %17, %6 : vector<1x288xi1>, vector<1x288xi32>
    %c16_i32 = arith.constant 16 : i32
    %19 = vector.broadcast %c16_i32 : i32 to vector<1x288xi32>
    %20 = arith.cmpi slt, %18, %19 : vector<1x288xi32>
    %cst = arith.constant 0.000000e+00 : f32
    %cst_6 = arith.constant -1.000000e+30 : f32
    %21 = vector.broadcast %cst : f32 to vector<1x288xf32>
    %22 = vector.broadcast %cst_6 : f32 to vector<1x288xf32>
    %23 = arith.select %20, %21, %22 : vector<1x288xi1>, vector<1x288xf32>
    %c0_i32_7 = arith.constant 0 : i32
    %24 = arith.index_cast %c0_i32_7 : i32 to index
    %c0_8 = arith.constant 0 : index
    %c0_9 = arith.constant 0 : index
    %25 = vector.load %arg1[%24, %c0_8, %c0_9] : memref<1x4x384xbf16, #tpu.memory_space<vmem>>, vector<1x4x384xbf16>
    %26 = vector.shape_cast %25 : vector<1x4x384xbf16> to vector<4x384xbf16>
    %27 = vector.extract_strided_slice %26 {offsets = [0, 0], sizes = [4, 288], strides = [1, 1]} : vector<4x384xbf16> to vector<4x288xbf16>
    %c0_10 = arith.constant 0 : index
    %c0_11 = arith.constant 0 : index
    %28 = vector.load %arg6[%c0_10, %c0_11] : memref<36x288xbf16, #tpu.memory_space<vmem>>, vector<4x288xbf16>
    tpu.vector_store %arg6[%c0_10, %c0_11], %27 {strides = array<i32>} : memref<36x288xbf16, #tpu.memory_space<vmem>>, vector<4x288xbf16>,
    %29 = vector.extract_strided_slice %26 {offsets = [0, 1], sizes = [4, 288], strides = [1, 1]} : vector<4x384xbf16> to vector<4x288xbf16>
    %c4 = arith.constant 4 : index
    %c0_12 = arith.constant 0 : index
    %30 = vector.load %arg6[%c4, %c0_12] : memref<36x288xbf16, #tpu.memory_space<vmem>>, vector<4x288xbf16>
    tpu.vector_store %arg6[%c4, %c0_12], %29 {strides = array<i32>} : memref<36x288xbf16, #tpu.memory_space<vmem>>, vector<4x288xbf16>,
    %31 = vector.extract_strided_slice %26 {offsets = [0, 2], sizes = [4, 288], strides = [1, 1]} : vector<4x384xbf16> to vector<4x288xbf16>
    %c8 = arith.constant 8 : index
    %c0_13 = arith.constant 0 : index
    %32 = vector.load %arg6[%c8, %c0_13] : memref<36x288xbf16, #tpu.memory_space<vmem>>, vector<4x288xbf16>
    tpu.vector_store %arg6[%c8, %c0_13], %31 {strides = array<i32>} : memref<36x288xbf16, #tpu.memory_space<vmem>>, vector<4x288xbf16>,
    %33 = vector.extract_strided_slice %26 {offsets = [0, 18], sizes = [4, 288], strides = [1, 1]} : vector<4x384xbf16> to vector<4x288xbf16>
    %c12 = arith.constant 12 : index
    %c0_14 = arith.constant 0 : index
    %34 = vector.load %arg6[%c12, %c0_14] : memref<36x288xbf16, #tpu.memory_space<vmem>>, vector<4x288xbf16>
    tpu.vector_store %arg6[%c12, %c0_14], %33 {strides = array<i32>} : memref<36x288xbf16, #tpu.memory_space<vmem>>, vector<4x288xbf16>,
    %35 = vector.extract_strided_slice %26 {offsets = [0, 19], sizes = [4, 288], strides = [1, 1]} : vector<4x384xbf16> to vector<4x288xbf16>
    %c16 = arith.constant 16 : index
    %c0_15 = arith.constant 0 : index
    %36 = vector.load %arg6[%c16, %c0_15] : memref<36x288xbf16, #tpu.memory_space<vmem>>, vector<4x288xbf16>
    tpu.vector_store %arg6[%c16, %c0_15], %35 {strides = array<i32>} : memref<36x288xbf16, #tpu.memory_space<vmem>>, vector<4x288xbf16>,
    %37 = vector.extract_strided_slice %26 {offsets = [0, 20], sizes = [4, 288], strides = [1, 1]} : vector<4x384xbf16> to vector<4x288xbf16>
    %c20 = arith.constant 20 : index
    %c0_16 = arith.constant 0 : index
    %38 = vector.load %arg6[%c20, %c0_16] : memref<36x288xbf16, #tpu.memory_space<vmem>>, vector<4x288xbf16>
    tpu.vector_store %arg6[%c20, %c0_16], %37 {strides = array<i32>} : memref<36x288xbf16, #tpu.memory_space<vmem>>, vector<4x288xbf16>,
    %39 = vector.extract_strided_slice %26 {offsets = [0, 36], sizes = [4, 288], strides = [1, 1]} : vector<4x384xbf16> to vector<4x288xbf16>
    %c24 = arith.constant 24 : index
    %c0_17 = arith.constant 0 : index
    %40 = vector.load %arg6[%c24, %c0_17] : memref<36x288xbf16, #tpu.memory_space<vmem>>, vector<4x288xbf16>
    tpu.vector_store %arg6[%c24, %c0_17], %39 {strides = array<i32>} : memref<36x288xbf16, #tpu.memory_space<vmem>>, vector<4x288xbf16>,
    %41 = vector.extract_strided_slice %26 {offsets = [0, 37], sizes = [4, 288], strides = [1, 1]} : vector<4x384xbf16> to vector<4x288xbf16>
    %c28 = arith.constant 28 : index
    %c0_18 = arith.constant 0 : index
    %42 = vector.load %arg6[%c28, %c0_18] : memref<36x288xbf16, #tpu.memory_space<vmem>>, vector<4x288xbf16>
    tpu.vector_store %arg6[%c28, %c0_18], %41 {strides = array<i32>} : memref<36x288xbf16, #tpu.memory_space<vmem>>, vector<4x288xbf16>,
    %43 = vector.extract_strided_slice %26 {offsets = [0, 38], sizes = [4, 288], strides = [1, 1]} : vector<4x384xbf16> to vector<4x288xbf16>
    %c32 = arith.constant 32 : index
    %c0_19 = arith.constant 0 : index
    %44 = vector.load %arg6[%c32, %c0_19] : memref<36x288xbf16, #tpu.memory_space<vmem>>, vector<4x288xbf16>
    tpu.vector_store %arg6[%c32, %c0_19], %43 {strides = array<i32>} : memref<36x288xbf16, #tpu.memory_space<vmem>>, vector<4x288xbf16>,
    %c0_20 = arith.constant 0 : index
    %c0_21 = arith.constant 0 : index
    %45 = vector.load %arg6[%c0_20, %c0_21] : memref<36x288xbf16, #tpu.memory_space<vmem>>, vector<36x288xbf16>
    %cst_22 = arith.constant dense<0.000000e+00> : vector<32x288xf32>
    %46 = tpu.matmul %0, %45, %cst_22 {dimension_numbers = #tpu.dot_dimension_numbers<[1], [0], [0], [1], [0, 0, 1, 1], [], []>} : vector<32x36xbf16>, vector<36x288xbf16>, vector<32x288xf32> -> vector<32x288xf32>
    %47 = arith.index_cast %c0_i32_7 : i32 to index
    %c0_23 = arith.constant 0 : index
    %c0_24 = arith.constant 0 : index
    %48 = vector.load %arg3[%47, %c0_23, %c0_24] : memref<1x32x1xf32, #tpu.memory_space<vmem>>, vector<1x32x1xf32>
    %49 = vector.shape_cast %48 : vector<1x32x1xf32> to vector<32x1xf32>
    %50 = vector.broadcast %49 : vector<32x1xf32> to vector<32x288xf32>
    %51 = arith.addf %46, %50 : vector<32x288xf32>
    %52 = math.tanh %51 : vector<32x288xf32>
    %53 = arith.truncf %52 : vector<32x288xf32> to vector<32x288xbf16>
    %cst_25 = arith.constant dense<0.000000e+00> : vector<1x288xf32>
    %54 = tpu.matmul %1, %53, %cst_25 {dimension_numbers = #tpu.dot_dimension_numbers<[1], [0], [0], [1], [0, 0, 1, 1], [], []>} : vector<1x32xbf16>, vector<32x288xbf16>, vector<1x288xf32> -> vector<1x288xf32>
    %55 = arith.addf %54, %23 : vector<1x288xf32>
    %cst_26 = arith.constant dense<0xFF800000> : vector<1xf32>
    %56 = vector.multi_reduction <maximumf>, %55, %cst_26 [1] : vector<1x288xf32> to vector<1xf32>
    %57 = vector.shape_cast %56 : vector<1xf32> to vector<1x1xf32>
    %58 = vector.broadcast %57 : vector<1x1xf32> to vector<1x288xf32>
    %59 = arith.subf %55, %58 : vector<1x288xf32>
    %60 = math.exp %59 : vector<1x288xf32>
    %cst_27 = arith.constant dense<0.000000e+00> : vector<1xf32>
    %61 = vector.multi_reduction <add>, %60, %cst_27 [1] : vector<1x288xf32> to vector<1xf32>
    %62 = vector.shape_cast %61 : vector<1xf32> to vector<1x1xf32>
    %63 = tpu.reciprocal %62 {approx = true} : vector<1x1xf32> -> vector<1x1xf32>
    %64 = vector.broadcast %63 : vector<1x1xf32> to vector<1x288xf32>
    %65 = arith.mulf %60, %64 : vector<1x288xf32>
    %c16_28 = arith.constant 16 : index
    %c0_29 = arith.constant 0 : index
    %66 = vector.load %arg6[%c16_28, %c0_29] : memref<36x288xbf16, #tpu.memory_space<vmem>>, vector<4x288xbf16>
    %67 = arith.truncf %65 : vector<1x288xf32> to vector<1x288xbf16>
    %cst_30 = arith.constant dense<0.000000e+00> : vector<1x4xf32>
    %68 = tpu.matmul %67, %66, %cst_30 {dimension_numbers = #tpu.dot_dimension_numbers<[1], [1], [0], [0], [0, 0, 1, 0], [], []>} : vector<1x288xbf16>, vector<4x288xbf16>, vector<1x4xf32> -> vector<1x4xf32>
    %c0_31 = arith.constant 0 : index
    %69 = arith.index_cast %c0_i32_7 : i32 to index
    %c0_32 = arith.constant 0 : index
    %70 = vector.load %arg5[%c0_31, %69, %c0_32] : memref<1x1x4xf32, #tpu.memory_space<vmem>>, vector<1x1x4xf32>
    %71 = vector.shape_cast %70 : vector<1x1x4xf32> to vector<1x4xf32>
    %72 = vector.shape_cast %68 : vector<1x4xf32> to vector<1x1x4xf32>
    tpu.vector_store %arg5[%c0_31, %69, %c0_32], %72 {strides = array<i32>} : memref<1x1x4xf32, #tpu.memory_space<vmem>>, vector<1x1x4xf32>,
    %c1_i32_33 = arith.constant 1 : i32
    return
  }
  func.func @transform_0(%arg0: i32) -> (i32, i32, i32) {
    %c0_i32 = arith.constant 0 : i32
    %c0_i32_0 = arith.constant 0 : i32
    %c0_i32_1 = arith.constant 0 : i32
    return %arg0, %c0_i32, %c0_i32_0 : i32, i32, i32
  }
  func.func @transform_1(%arg0: i32) -> (i32, i32) {
    %c0_i32 = arith.constant 0 : i32
    %c0_i32_0 = arith.constant 0 : i32
    %c0_i32_1 = arith.constant 0 : i32
    return %c0_i32, %c0_i32_0 : i32, i32
  }
  func.func @transform_2(%arg0: i32) -> (i32, i32, i32) {
    %c0_i32 = arith.constant 0 : i32
    %c0_i32_0 = arith.constant 0 : i32
    %c0_i32_1 = arith.constant 0 : i32
    return %arg0, %c0_i32, %c0_i32_0 : i32, i32, i32
  }
  func.func @transform_3(%arg0: i32) -> (i32, i32) {
    %c0_i32 = arith.constant 0 : i32
    %c0_i32_0 = arith.constant 0 : i32
    %c0_i32_1 = arith.constant 0 : i32
    return %c0_i32, %c0_i32_0 : i32, i32
  }
  func.func @transform_4(%arg0: i32) -> (i32, i32, i32) {
    %c0_i32 = arith.constant 0 : i32
    %c0_i32_0 = arith.constant 0 : i32
    %c0_i32_1 = arith.constant 0 : i32
    return %arg0, %c0_i32, %c0_i32_0 : i32, i32, i32
  }
}

</mosaic_0001>

<llo_original>
// kernel: tpu_custom_call.1
$region0: #{tpu_custom_call.1}
  #allocation0 [shape = 'u32[]', space=smem, size = 0x4, offset = 0x4, fixed_abs, tag = 'smem constant byte address 0x4 - core index']
  #allocation1 [shape = 'u32[144,128]{1,0:T(1,128)}', space=vmem, size = 0x12000, scoped, tag = 'internal scratch']
  #allocation2 [shape = 'bf16[36,288]{1,0:T(8,128)(2,1)}', space=vmem, size = 0x7800, scoped, tag = 'scratch operand']
  %s0 = inlined_call_operand.vmem [shape: bf16[2,4,384], index: 0, kind: input, shape index: {}]
  %s1 = inlined_call_operand.vmem [shape: bf16[32,36], index: 1, kind: input, shape index: {}]
  %s2 = inlined_call_operand.vmem [shape: f32[2,32,1], index: 2, kind: input, shape index: {}]
  %s3 = inlined_call_operand.vmem [shape: bf16[1,32], index: 3, kind: input, shape index: {}]
  %s4 = inlined_call_operand.hbm [shape: f32[2,1,4], index: 4, kind: output, shape index: {}]
  %s5 = sld [smem:[#allocation0]]
  $region49: #{tpu_custom_call.1} parent=0
    _
  %s7 = ssub.s32 1, %s5
  %s8 = scalar_select 0, %s7, %s5
  $region1: #{tpu_custom_call.1} parent=0
    #allocation3 [shape = 'u8[1024]{0}', space=vmem, size = 0x400, scoped, tag = 'output window, operand 0']
    #allocation4 [shape = 's32[2]{0}', space=sflag, size = 0x8, scoped, tag = 'scoped memory for tpu_custom_call.1']
    %9 = vsyncpa [#allocation4], 0
    %s10 = scalar_lea.sflag [#allocation4], 1
    %11 = vsyncpa %s10, 0
    loop: start=0, step=1, limit=4
    $region2: #{tpu_custom_call.1} parent=1 // loop_pre_header
      _
    $region3: #{tpu_custom_call.1} parent=1 // loop_header
      %s13 = sphi 0, %s17
      %p14 = scmp.ge.s32.totalorder %s13, 4
      %s23 = sphi 0, %s25
      %s26 = sphi 0, %s23
      %s27 = sphi 0, %s26
      %s43 = sphi 0, %s27
      %s47 = sphi 0, %s47
      %s49 = sphi 0, %s47
      %s50 = sphi 0, %s49
      %s64 = sphi 0, %s50
      %s70 = sphi 0, %s72
      %s73 = sphi 0, %s70
      %s74 = sphi 0, %s73
      %s90 = sphi 0, %s74
      %s94 = sphi 0, %s94
      %s96 = sphi 0, %s94
      %s97 = sphi 0, %s96
      %s111 = sphi 0, %s97
      %s117 = sphi 0, %s119
      %s120 = sphi 0, %s117
      %s121 = sphi 0, %s120
      %s137 = sphi 0, %s121
    $region4: #{tpu_custom_call.1} parent=1 // loop_header_branch
      %16 = sbr.rel (%p14) target = $region8
    $region5: #{tpu_custom_call.1} parent=1 // loop_body
      %s18 = ssub.s32 %s13, 1
      %s19 = ssub.s32 %s13, 2
      %s20 = sadd.s32 %s13, 1
      %s21 = ssub.s32 %s13, %s20
      %p22 = scmp.eq.s32.totalorder %s21, 0
      %s24 = sadd.s32 %s23, 1
      %s25 = scalar_select %p22, %s23, %s24
      %p28 = pneg %p22
      %p29 = scmp.eq.s32.totalorder %s13, 1
      %p30 = por %p28, %p29
      %p31 = scmp.ne.s32.totalorder %s23, %s26
      %p32 = scmp.eq.s32.totalorder %s13, 0
      %p33 = por %p31, %p32
      %p34 = scmp.ne.s32.totalorder %s23, %s26
      %p35 = scmp.eq.s32.totalorder %s18, 1
      %p36 = por %p34, %p35
      %p37 = scmp.ne.s32.totalorder %s26, %s27
      %p38 = scmp.eq.s32.totalorder %s18, 0
      %p39 = por %p37, %p38
      %p40 = scmp.ne.s32.totalorder %s26, %s27
      %p41 = scmp.eq.s32.totalorder %s19, 1
      %p42 = por %p40, %p41
      %p44 = scmp.ne.s32.totalorder %s27, %s43
      %p45 = scmp.eq.s32.totalorder %s19, 0
      %p46 = por %p44, %p45
      %s48 = sadd.s32 %s47, 1
      %p51 = scmp.eq.s32.totalorder %s13, 1
      %p52 = scmp.ne.s32.totalorder %s47, %s49
      %p53 = scmp.eq.s32.totalorder %s13, 0
      %p54 = por %p52, %p53
      %p55 = scmp.ne.s32.totalorder %s47, %s49
      %p56 = scmp.eq.s32.totalorder %s18, 1
      %p57 = por %p55, %p56
      %p58 = scmp.ne.s32.totalorder %s49, %s50
      %p59 = scmp.eq.s32.totalorder %s18, 0
      %p60 = por %p58, %p59
      %p61 = scmp.ne.s32.totalorder %s49, %s50
      %p62 = scmp.eq.s32.totalorder %s19, 1
      %p63 = por %p61, %p62
      %p65 = scmp.ne.s32.totalorder %s50, %s64
      %p66 = scmp.eq.s32.totalorder %s19, 0
      %p67 = por %p65, %p66
      %s68 = ssub.s32 %s13, %s20
      %p69 = scmp.eq.s32.totalorder %s68, 0
      %s71 = sadd.s32 %s70, 1
      %s72 = scalar_select %p69, %s70, %s71
      %p75 = pneg %p69
      %p76 = scmp.eq.s32.totalorder %s13, 1
      %p77 = por %p75, %p76
      %p78 = scmp.ne.s32.totalorder %s70, %s73
      %p79 = scmp.eq.s32.totalorder %s13, 0
      %p80 = por %p78, %p79
      %p81 = scmp.ne.s32.totalorder %s70, %s73
      %p82 = scmp.eq.s32.totalorder %s18, 1
      %p83 = por %p81, %p82
      %p84 = scmp.ne.s32.totalorder %s73, %s74
      %p85 = scmp.eq.s32.totalorder %s18, 0
      %p86 = por %p84, %p85
      %p87 = scmp.ne.s32.totalorder %s73, %s74
      %p88 = scmp.eq.s32.totalorder %s19, 1
      %p89 = por %p87, %p88
      %p91 = scmp.ne.s32.totalorder %s74, %s90
      %p92 = scmp.eq.s32.totalorder %s19, 0
      %p93 = por %p91, %p92
      %s95 = sadd.s32 %s94, 1
      %p98 = scmp.eq.s32.totalorder %s13, 1
      %p99 = scmp.ne.s32.totalorder %s94, %s96
      %p100 = scmp.eq.s32.totalorder %s13, 0
      %p101 = por %p99, %p100
      %p102 = scmp.ne.s32.totalorder %s94, %s96
      %p103 = scmp.eq.s32.totalorder %s18, 1
      %p104 = por %p102, %p103
      %p105 = scmp.ne.s32.totalorder %s96, %s97
      %p106 = scmp.eq.s32.totalorder %s18, 0
      %p107 = por %p105, %p106
      %p108 = scmp.ne.s32.totalorder %s96, %s97
      %p109 = scmp.eq.s32.totalorder %s19, 1
      %p110 = por %p108, %p109
      %p112 = scmp.ne.s32.totalorder %s97, %s111
      %p113 = scmp.eq.s32.totalorder %s19, 0
      %p114 = por %p112, %p113
      %s115 = ssub.s32 %s13, %s20
      %p116 = scmp.eq.s32.totalorder %s115, 0
      %s118 = sadd.s32 %s117, 1
      %s119 = scalar_select %p116, %s117, %s118
      %p122 = pneg %p116
      %p123 = scmp.eq.s32.totalorder %s13, 1
      %p124 = por %p122, %p123
      %p125 = scmp.ne.s32.totalorder %s117, %s120
      %p126 = scmp.eq.s32.totalorder %s13, 0
      %p127 = por %p125, %p126
      %p128 = scmp.ne.s32.totalorder %s117, %s120
      %p129 = scmp.eq.s32.totalorder %s18, 1
      %p130 = por %p128, %p129
      %p131 = scmp.ne.s32.totalorder %s120, %s121
      %p132 = scmp.eq.s32.totalorder %s18, 0
      %p133 = por %p131, %p132
      %p134 = scmp.ne.s32.totalorder %s120, %s121
      %p135 = scmp.eq.s32.totalorder %s19, 1
      %p136 = por %p134, %p135
      %p138 = scmp.ne.s32.totalorder %s121, %s137
      %p139 = scmp.eq.s32.totalorder %s19, 0
      %p140 = por %p138, %p139
      %p141 = scmp.le.s32.totalorder 1, %s13
      %p142 = scmp.lt.s32.totalorder %s13, 3
      %p143 = pnand %p141, %p142
      %p144 = pneg %p143
      // Predicated region
      $region9: #{tpu_custom_call.1} parent=5 // pred_check
        _
      $region10: #{tpu_custom_call.1} parent=5 // pred_check_branch
        %146 = sbr.rel (%p143) target = $region12
      $region11: #{tpu_custom_call.1} parent=5 // pred_region
        %s147 = ssub.s32 %s13, 1
        // Predicated region
        $region13: #{tpu_custom_call.1} parent=11 // pred_check
          %p148 = pneg %p60
        $region14: #{tpu_custom_call.1} parent=11 // pred_check_branch
          %150 = sbr.rel (%p148) target = $region16
        $region15: #{tpu_custom_call.1} parent=11 // pred_region
          _
        $region16: #{tpu_custom_call.1} parent=11 // pred_fallthru
          _
        // Predicated region
        $region17: #{tpu_custom_call.1} parent=11 // pred_check
          %p151 = pneg %p107
        $region18: #{tpu_custom_call.1} parent=11 // pred_check_branch
          %153 = sbr.rel (%p151) target = $region20
        $region19: #{tpu_custom_call.1} parent=11 // pred_region
          _
        $region20: #{tpu_custom_call.1} parent=11 // pred_fallthru
          _
      $region12: #{tpu_custom_call.1} parent=5 // pred_fallthru
        _
      %p154 = scmp.lt.s32.totalorder %s13, 2
      // Predicated region
      $region21: #{tpu_custom_call.1} parent=5 // pred_check
        %p155 = pneg %p154
      $region22: #{tpu_custom_call.1} parent=5 // pred_check_branch
        %157 = sbr.rel (%p155) target = $region24
      $region23: #{tpu_custom_call.1} parent=5 // pred_region
        // Predicated region
        $region25: #{tpu_custom_call.1} parent=23 // pred_check
          %p158 = pneg %p33
        $region26: #{tpu_custom_call.1} parent=23 // pred_check_branch
          %160 = sbr.rel (%p158) target = $region28
        $region27: #{tpu_custom_call.1} parent=23 // pred_region
          %p161 = scmp.lt.s32.totalorder %s13, 1
          %s162 = scalar_select %p161, %s13, 1
          %s163 = smul.addr %s162, 3
          %s164 = smul.addr %s163, 2
          %s165 = scalar_lea.vmem %s0, %s164
        $region28: #{tpu_custom_call.1} parent=23 // pred_fallthru
          _
        // Predicated region
        $region29: #{tpu_custom_call.1} parent=23 // pred_check
          %p166 = pneg %p80
        $region30: #{tpu_custom_call.1} parent=23 // pred_check_branch
          %168 = sbr.rel (%p166) target = $region32
        $region31: #{tpu_custom_call.1} parent=23 // pred_region
          %p169 = scmp.lt.s32.totalorder %s13, 1
          %s170 = scalar_select %p169, %s13, 1
          %s171 = smul.addr %s170, 4
          %s172 = smul.addr %s171, 8
          %s173 = scalar_lea.vmem %s2, %s172
        $region32: #{tpu_custom_call.1} parent=23 // pred_fallthru
          _
      $region24: #{tpu_custom_call.1} parent=5 // pred_fallthru
        _
      %p174 = scmp.le.s32.totalorder 1, %s13
      %p175 = scmp.lt.s32.totalorder %s13, 3
      %p176 = pnand %p174, %p175
      %p177 = pneg %p176
      // Predicated region
      $region33: #{tpu_custom_call.1} parent=5 // pred_check
        _
      $region34: #{tpu_custom_call.1} parent=5 // pred_check_branch
        %179 = sbr.rel (%p176) target = $region36
      $region35: #{tpu_custom_call.1} parent=5 // pred_region
        %s180 = ssub.s32 %s13, 1
        %p181 = scmp.lt.s32.totalorder %s18, 1
        %s182 = scalar_select %p181, %s18, 1
        %s183 = smul.addr %s182, 3
        %s184 = smul.addr %s183, 2
        %s185 = scalar_lea.vmem %s0, %s184
        %p186 = pneg %p39
        %p187 = pneg %p36
        %p188 = pneg %p60
        %p189 = pneg %p57
        %p190 = scmp.lt.s32.totalorder %s18, 1
        %s191 = scalar_select %p190, %s18, 1
        %s192 = smul.addr %s191, 4
        %s193 = smul.addr %s192, 8
        %s194 = scalar_lea.vmem %s2, %s193
        %p195 = pneg %p86
        %p196 = pneg %p83
        %p197 = pneg %p107
        %p198 = pneg %p104
        %p199 = pneg %p133
        %p200 = pneg %p130
        %s201 = sand.u32 %s120, 1
        %s202 = scalar_lea.sflag [#allocation4], %s201
        %s203 = sand.u32 %s120, 1
        %s204 = scalar_lea.vmem [#allocation3], %s203
        %p205 = scmp.lt.s32.totalorder %s18, 1
        %s206 = scalar_select %p205, %s18, 1
        %s207 = smul.addr %s206, 3
        %s208 = smul.addr %s207, 2
        %s209 = scalar_lea.vmem %s0, %s208
        %p210 = scmp.lt.s32.totalorder %s18, 1
        %s211 = scalar_select %p210, %s18, 1
        %s212 = smul.addr %s211, 4
        %s213 = smul.addr %s212, 8
        %s214 = scalar_lea.vmem %s2, %s213
        %v216 = vld [vmem:[%s1] sm:$0xf]
        %v217 = vld [vmem:[%s1 + $0x4] sm:$0xf]
        %v218 = vld [vmem:[%s1 + $0x8] sm:$0xf]
        %v219 = vld [vmem:[%s1 + $0xc] sm:$0xf]
        %v220 = vld [vmem:[%s3] sm:$0x1]
        %v221 = vlaneseq
        %v222 = vand.u32 %v221, 127
        %v223 = vadd.s32 %v222, 128
        %v224 = vadd.s32 %v222, 256
        %vm225 = vcmp.lt.s32.totalorder %v222, 0
        %v226 = vsub.s32 0, %v222
        %v227 = vsel %vm225, %v226, %v222
        %v228 = vmul.u32.u64.compose %v227, 3817748708
        %v229 = vextract.low.u32 %v228
        %v230 = vextract.high.u32 %v228
        %v231 = vshrl.u32 %v230, 4
        %v232 = vmul.u32 %v231, 18
        %v233 = vsub.s32 %v227, %v232
        %v234 = vsub.s32 0, %v233
        %v235 = vsel %vm225, %v234, %v233
        %vm236 = vcmp.lt.s32.totalorder %v223, 0
        %v237 = vsub.s32 0, %v223
        %v238 = vsel %vm236, %v237, %v223
        %v239 = vmul.u32.u64.compose %v238, 3817748708
        %v240 = vextract.low.u32 %v239
        %v241 = vextract.high.u32 %v239
        %v242 = vshrl.u32 %v241, 4
        %v243 = vmul.u32 %v242, 18
        %v244 = vsub.s32 %v238, %v243
        %v245 = vsub.s32 0, %v244
        %v246 = vsel %vm236, %v245, %v244
        %vm247 = vcmp.lt.s32.totalorder %v224, 0
        %v248 = vsub.s32 0, %v224
        %v249 = vsel %vm247, %v248, %v224
        %v250 = vmul.u32.u64.compose %v249, 3817748708
        %v251 = vextract.low.u32 %v250
        %v252 = vextract.high.u32 %v250
        %v253 = vshrl.u32 %v252, 4
        %v254 = vmul.u32 %v253, 18
        %v255 = vsub.s32 %v249, %v254
        %v256 = vsub.s32 0, %v255
        %v257 = vsel %vm247, %v256, %v255
        %vm258 = vcmp.ne.s32.totalorder %v235, 0
        %vm259 = vcmp.ne.s32.totalorder %v246, 0
        %vm260 = vcmp.ne.s32.totalorder %v257, 0
        %vm261 = vcmp.lt.s32.totalorder %v235, 0
        %vm262 = vcmp.lt.s32.totalorder %v246, 0
        %vm263 = vcmp.lt.s32.totalorder %v257, 0
        %vm264 = vmand %vm261, %vm258
        %vm265 = vmand %vm262, %vm259
        %vm266 = vmand %vm263, %vm260
        %v267 = vadd.s32 %v235, 18
        %v268 = vadd.s32 %v246, 18
        %v269 = vadd.s32 %v257, 18
        %v270 = vsel %vm264, %v267, %v235
        %v271 = vsel %vm265, %v268, %v246
        %v272 = vsel %vm266, %v269, %v257
        %vm273 = vcmp.lt.s32.totalorder %v270, 16
        %vm274 = vcmp.lt.s32.totalorder %v271, 16
        %vm275 = vcmp.lt.s32.totalorder %v272, 16
        %v276 = vsel %vm273, 0.0, -1e+30
        %v277 = vsel %vm274, 0.0, -1e+30
        %v278 = vsel %vm275, 0.0, -1e+30
        %v279 = vld [vmem:[%s209] sm:$0x3f]
        %v281 = vcombine.high %v279, %v279
        %v283 = vunpack.c.l.s4 1983009808
        %v284 = vunpack.c.0.s8 %v283
        %v285 = vlaneseq
        %v286 = vshrl.u32 %v285, 7
        %v287 = vsub.s32 %v284, %v286
        %v288 = vrot.slane %v279, %v287
        %v290 = vunpack.c.l.s4 1983009808
        %v291 = vunpack.c.0.s8 %v290
        %v292 = vlaneseq
        %v293 = vshrl.u32 %v292, 7
        %v294 = vsub.s32 %v291, %v293
        %v295 = vrot.slane %v281, %v294
        %298 = vst [vmem:[#allocation2] sm:$0x33] %v288
        %vm299 = vcmask 254976
        %300 = vst.msk [vmem:[#allocation2 + $0x8] sm:$0x3] %vm299, %v295
        %v301 = vcombine.low %v279, %v279
        %v303 = vunpack.c.l.s4 1983009808
        %v304 = vunpack.c.0.s8 %v303
        %v305 = vlaneseq
        %v306 = vshrl.u32 %v305, 7
        %v307 = vsub.s32 %v304, %v306
        %v308 = vrot.slane %v301, %v307
        %309 = vrot.lane.b32.xlu0 %v308, 127
        %v310 = vpop.permute.xlu0 %309
        %311 = vrot.lane.b32.xlu0 %v288, 127
        %v312 = vpop.permute.xlu0 %311
        %v313 = vrot.slane %v310, 4
        %v314 = vrot.slane %v312, 4
        %vm315 = vcmask 1043456
        %v316 = vsel %vm315, %v313, %v314
        %vm317 = vcmask 1039360
        %v318 = vsel %vm317, %v310, %v316
        %321 = vst [vmem:[#allocation2] sm:$0xcc] %v318
        %vm322 = vcmask 257026
        %323 = vst.msk [vmem:[#allocation2 + $0x8] sm:$0xc] %vm322, %v312
        %324 = vrot.lane.b32.xlu0 %v288, 126
        %v325 = vpop.permute.xlu0 %324
        %326 = vrot.lane.b32.xlu0 %v295, 126
        %v327 = vpop.permute.xlu0 %326
        %v328 = vrot.slane %v325, 4
        %v329 = vrot.slane %v327, 4
        %v330 = vsel %vm315, %v328, %v329
        %vm331 = vcmask 1031168
        %v332 = vsel %vm331, %v325, %v330
        %335 = vst [vmem:[#allocation2 + $0xc] sm:$0x33] %v332
        %336 = vst.msk [vmem:[#allocation2 + $0x14] sm:$0x3] %vm299, %v327
        %337 = vrot.lane.b32.xlu0 %v308, 110
        %v338 = vpop.permute.xlu0 %337
        %339 = vrot.lane.b32.xlu0 %v288, 110
        %v340 = vpop.permute.xlu0 %339
        %v341 = vrot.slane %v338, 4
        %v342 = vrot.slane %v340, 4
        %v343 = vsel %vm315, %v341, %v342
        %vm344 = vcmask 900096
        %v345 = vsel %vm344, %v338, %v343
        %348 = vst [vmem:[#allocation2 + $0xc] sm:$0xcc] %v345
        %349 = vst.msk [vmem:[#allocation2 + $0x14] sm:$0xc] %vm322, %v340
        %350 = vrot.lane.b32.xlu0 %v288, 109
        %v351 = vpop.permute.xlu0 %350
        %352 = vrot.lane.b32.xlu0 %v295, 109
        %v353 = vpop.permute.xlu0 %352
        %v354 = vrot.slane %v351, 4
        %v355 = vrot.slane %v353, 4
        %v356 = vsel %vm315, %v354, %v355
        %vm357 = vcmask 891904
        %v358 = vsel %vm357, %v351, %v356
        %361 = vst [vmem:[#allocation2 + $0x18] sm:$0x33] %v358
        %362 = vst.msk [vmem:[#allocation2 + $0x20] sm:$0x3] %vm299, %v353
        %363 = vrot.lane.b32.xlu0 %v308, 108
        %v364 = vpop.permute.xlu0 %363
        %365 = vrot.lane.b32.xlu0 %v288, 108
        %v366 = vpop.permute.xlu0 %365
        %v367 = vrot.slane %v364, 4
        %v368 = vrot.slane %v366, 4
        %v369 = vsel %vm315, %v367, %v368
        %vm370 = vcmask 883712
        %v371 = vsel %vm370, %v364, %v369
        %374 = vst [vmem:[#allocation2 + $0x18] sm:$0xcc] %v371
        %375 = vst.msk [vmem:[#allocation2 + $0x20] sm:$0xc] %vm322, %v366
        %376 = vrot.lane.b32.xlu0 %v288, 92
        %v377 = vpop.permute.xlu0 %376
        %378 = vrot.lane.b32.xlu0 %v295, 92
        %v379 = vpop.permute.xlu0 %378
        %v380 = vrot.slane %v377, 4
        %v381 = vrot.slane %v379, 4
        %v382 = vsel %vm315, %v380, %v381
        %vm383 = vcmask 752640
        %v384 = vsel %vm383, %v377, %v382
        %387 = vst [vmem:[#allocation2 + $0x24] sm:$0x33] %v384
        %388 = vst.msk [vmem:[#allocation2 + $0x2c] sm:$0x3] %vm299, %v379
        %389 = vrot.lane.b32.xlu0 %v308, 91
        %v390 = vpop.permute.xlu0 %389
        %391 = vrot.lane.b32.xlu0 %v288, 91
        %v392 = vpop.permute.xlu0 %391
        %v393 = vrot.slane %v390, 4
        %v394 = vrot.slane %v392, 4
        %v395 = vsel %vm315, %v393, %v394
        %vm396 = vcmask 744448
        %v397 = vsel %vm396, %v390, %v395
        %400 = vst [vmem:[#allocation2 + $0x24] sm:$0xcc] %v397
        %401 = vst.msk [vmem:[#allocation2 + $0x2c] sm:$0xc] %vm322, %v392
        %402 = vrot.lane.b32.xlu0 %v288, 90
        %v403 = vpop.permute.xlu0 %402
        %404 = vrot.lane.b32.xlu0 %v295, 90
        %v405 = vpop.permute.xlu0 %404
        %v406 = vrot.slane %v403, 4
        %v407 = vrot.slane %v405, 4
        %v408 = vsel %vm315, %v406, %v407
        %vm409 = vcmask 736256
        %v410 = vsel %vm409, %v403, %v408
        %413 = vst [vmem:[#allocation2 + $0x30] sm:$0x33] %v410
        %414 = vst.msk [vmem:[#allocation2 + $0x38] sm:$0x3] %vm299, %v405
        %v415 = vld [vmem:[#allocation2] sm:$0xff]
        %v416 = vld [vmem:[#allocation2 + $0x8] sm:$0xf]
        %v417 = vld [vmem:[#allocation2 + $0xc] sm:$0xff]
        %v418 = vld [vmem:[#allocation2 + $0x14] sm:$0xf]
        %v419 = vld [vmem:[#allocation2 + $0x18] sm:$0xff]
        %v420 = vld [vmem:[#allocation2 + $0x20] sm:$0xf]
        %v421 = vld [vmem:[#allocation2 + $0x24] sm:$0xff]
        %v422 = vld [vmem:[#allocation2 + $0x2c] sm:$0xf]
        %v423 = vld [vmem:[#allocation2 + $0x30] sm:$0x33]
        %v424 = vld [vmem:[#allocation2 + $0x38] sm:$0x3]
        %v425 = vld [vmem:[%s214] sm:$0xff]
        %v426 = vld [vmem:[%s214 + $0x8] sm:$0xff]
        %v427 = vld [vmem:[%s214 + $0x10] sm:$0xff]
        %v428 = vld [vmem:[%s214 + $0x18] sm:$0xff]
        %430 = vset.pattern.permute.xlu0 0
        %431 = vperm.xlu0 %430, %v425
        %v432 = vpop.permute.xlu0 %431
        %435 = vset.pattern.permute.xlu0 0
        %436 = vperm.xlu0 %435, %v426
        %v437 = vpop.permute.xlu0 %436
        %440 = vset.pattern.permute.xlu0 0
        %441 = vperm.xlu0 %440, %v427
        %v442 = vpop.permute.xlu0 %441
        %445 = vset.pattern.permute.xlu0 0
        %446 = vperm.xlu0 %445, %v428
        %v447 = vpop.permute.xlu0 %446
        %v453 = vunpack.c.l.b16 %v216
        %v454 = vunpack.c.l.b16 %v217
        %v455 = vunpack.c.l.b16 %v218
        %v456 = vunpack.c.l.b16 %v219
        %v457 = vpack.c.b16 %v454, %v453
        %v458 = vpack.c.b16 %v456, %v455
        %v469 = vunpack.c.l.b16 %v415
        %v470 = vunpack.c.h.b16 %v415
        %v471 = vunpack.c.l.b16 %v416
        %v472 = vunpack.c.l.b16 %v417
        %v473 = vunpack.c.h.b16 %v417
        %v474 = vunpack.c.l.b16 %v418
        %v475 = vunpack.c.l.b16 %v419
        %v476 = vunpack.c.h.b16 %v419
        %v477 = vunpack.c.l.b16 %v420
        %v478 = vunpack.c.l.b16 %v421
        %v479 = vunpack.c.h.b16 %v421
        %v480 = vunpack.c.l.b16 %v422
        %v481 = vunpack.c.l.b16 %v423
        %v482 = vunpack.c.h.b16 %v423
        %v483 = vunpack.c.l.b16 %v424
        %v484 = vpack.c.b16 %v472, %v469
        %v485 = vpack.c.b16 %v473, %v470
        %v486 = vpack.c.b16 %v474, %v471
        %v487 = vpack.c.b16 %v478, %v475
        %v488 = vpack.c.b16 %v479, %v476
        %v489 = vpack.c.b16 %v480, %v477
        %v490 = vpack.c.b16 %v481, %v481
        %v491 = vpack.c.b16 %v482, %v482
        %v492 = vpack.c.b16 %v483, %v483
        %vm499 = vcmask 293888
        %v501 = vsel %vm499, %v457, 0
        %v504 = vsel %vm499, %v458, 0
        %vm506 = vcmask 1041408
        %v508 = vsel %vm506, %v490, 0
        %v511 = vsel %vm506, %v491, 0
        %v514 = vsel %vm506, %v492, 0
        %516 = vmatprep.subr.bf16.mxu0 %v485
        %517 = vmatpush1.bf16.msra.mxu0 %v484
        %518 = vmatprep.subr.bf16.mxu0 %v488
        %519 = vmatpush1.bf16.msra.mxu0 %v487
        %520 = vmatprep.subr.bf16.mxu0 %v511
        %521 = vmatpush1.bf16.msra.mxu0 %v508
        %522 = vmatprep.subr.bf16.mxu0 0
        %523 = vmatpush1.bf16.msra.mxu0 0
        %524 = vmatprep.subr.bf16.mxu0 0
        %525 = vmatpush1.bf16.msra.mxu0 0
        %526 = vmatprep.subr.bf16.mxu0 0
        %527 = vmatpush1.bf16.msra.mxu0 0
        %528 = vmatprep.subr.bf16.mxu0 0
        %529 = vmatpush1.bf16.msra.mxu0 0
        %530 = vmatprep.subr.bf16.mxu0 0
        %531 = vmatpush1.bf16.msra.mxu0 0
        %532 = vmatprep.subr.bf16.mxu0 0
        %533 = vmatpush1.bf16.msra.mxu0 0
        %534 = vmatprep.subr.bf16.mxu0 0
        %535 = vmatpush1.bf16.msra.mxu0 0
        %536 = vmatprep.subr.bf16.mxu0 0
        %537 = vmatpush1.bf16.msra.mxu0 0
        %538 = vmatprep.subr.bf16.mxu0 0
        %539 = vmatpush1.bf16.msra.mxu0 0
        %540 = vmatprep.subr.bf16.mxu0 0
        %541 = vmatpush1.bf16.msra.mxu0 0
        %542 = vmatprep.subr.bf16.mxu0 0
        %543 = vmatpush1.bf16.msra.mxu0 0
        %544 = vmatprep.subr.bf16.mxu0 0
        %545 = vmatpush1.bf16.msra.mxu0 0
        %546 = vmatprep.subr.bf16.mxu0 0
        %547 = vmatpush1.bf16.msra.mxu0 0
        %548 = vmatprep.mubr.bf16.mxu0 0
        %549 = vmatmul.mubr.bf16.gmra.mrb[0].mxu0 %v501
        %v550 = vpop.f32.mrb[0].mxu0
        %v551 = vadd.f32 %v432, %v550
        %v552 = vpop.f32.mrb[0].mxu0
        %v553 = vadd.f32 %v432, %v552
        %v554 = vpop.f32.mrb[0].mxu0
        %v555 = vadd.f32 %v437, %v554
        %v556 = vpop.f32.mrb[0].mxu0
        %v557 = vadd.f32 %v437, %v556
        %558 = vmatprep.mubr.bf16.mxu0 0
        %559 = vmatmul.mubr.bf16.gmra.mrb[0].mxu0 %v504
        %v560 = vpop.f32.mrb[0].mxu0
        %v561 = vadd.f32 %v442, %v560
        %v562 = vpop.f32.mrb[0].mxu0
        %v563 = vadd.f32 %v442, %v562
        %v564 = vpop.f32.mrb[0].mxu0
        %v565 = vadd.f32 %v447, %v564
        %v566 = vpop.f32.mrb[0].mxu0
        %v567 = vadd.f32 %v447, %v566
        %568 = vdwg.mxu0
        %569 = vmatprep.subr.bf16.mxu0 0
        %570 = vmatpush1.bf16.msra.mxu0 %v486
        %571 = vmatprep.subr.bf16.mxu0 0
        %572 = vmatpush1.bf16.msra.mxu0 %v489
        %573 = vmatprep.subr.bf16.mxu0 0
        %574 = vmatpush1.bf16.msra.mxu0 %v514
        %575 = vmatprep.subr.bf16.mxu0 0
        %576 = vmatpush1.bf16.msra.mxu0 0
        %577 = vmatprep.subr.bf16.mxu0 0
        %578 = vmatpush1.bf16.msra.mxu0 0
        %579 = vmatprep.subr.bf16.mxu0 0
        %580 = vmatpush1.bf16.msra.mxu0 0
        %581 = vmatprep.subr.bf16.mxu0 0
        %582 = vmatpush1.bf16.msra.mxu0 0
        %583 = vmatprep.subr.bf16.mxu0 0
        %584 = vmatpush1.bf16.msra.mxu0 0
        %585 = vmatprep.subr.bf16.mxu0 0
        %586 = vmatpush1.bf16.msra.mxu0 0
        %587 = vmatprep.subr.bf16.mxu0 0
        %588 = vmatpush1.bf16.msra.mxu0 0
        %589 = vmatprep.subr.bf16.mxu0 0
        %590 = vmatpush1.bf16.msra.mxu0 0
        %591 = vmatprep.subr.bf16.mxu0 0
        %592 = vmatpush1.bf16.msra.mxu0 0
        %593 = vmatprep.subr.bf16.mxu0 0
        %594 = vmatpush1.bf16.msra.mxu0 0
        %595 = vmatprep.subr.bf16.mxu0 0
        %596 = vmatpush1.bf16.msra.mxu0 0
        %597 = vmatprep.subr.bf16.mxu0 0
        %598 = vmatpush1.bf16.msra.mxu0 0
        %599 = vmatprep.subr.bf16.mxu0 0
        %600 = vmatpush1.bf16.msra.mxu0 0
        %601 = vmatprep.mubr.bf16.mxu0 0
        %602 = vmatmul.mubr.bf16.gmra.mrb[0].mxu0 %v501
        %v603 = vpop.f32.mrb[0].mxu0
        %v604 = vadd.f32 %v432, %v603
        %v605 = vpop.f32.mrb[0].mxu0
        %v606 = vpop.f32.mrb[0].mxu0
        %v607 = vadd.f32 %v437, %v606
        %v608 = vpop.f32.mrb[0].mxu0
        %609 = vmatprep.mubr.bf16.mxu0 0
        %610 = vmatmul.mubr.bf16.gmra.mrb[0].mxu0 %v504
        %v611 = vpop.f32.mrb[0].mxu0
        %v612 = vadd.f32 %v442, %v611
        %v613 = vpop.f32.mrb[0].mxu0
        %v614 = vpop.f32.mrb[0].mxu0
        %v615 = vadd.f32 %v447, %v614
        %v616 = vpop.f32.mrb[0].mxu0
        %617 = vdwg.mxu0
        %v618 = vtanh.pop %v551
        %v619 = vtanh.pop %v553
        %v620 = vtanh.pop %v604
        %v621 = vtanh.pop %v555
        %v622 = vtanh.pop %v557
        %v623 = vtanh.pop %v607
        %v624 = vtanh.pop %v561
        %v625 = vtanh.pop %v563
        %v626 = vtanh.pop %v612
        %v627 = vtanh.pop %v565
        %v628 = vtanh.pop %v567
        %v629 = vtanh.pop %v615
        %v630 = vpack.c.bf16 %v621, %v618
        %v631 = vpack.c.bf16 %v622, %v619
        %v632 = vpack.c.bf16 %v623, %v620
        %v633 = vpack.c.bf16 %v627, %v624
        %v634 = vpack.c.bf16 %v628, %v625
        %v635 = vpack.c.bf16 %v629, %v626
        %vm636 = vcmask 261120
        %v638 = vsel %vm636, %v220, 0
        %640 = vmatprep.subr.bf16.mxu0 %v631
        %641 = vmatpush1.bf16.msra.mxu0 %v630
        %642 = vmatprep.subr.bf16.mxu0 %v634
        %643 = vmatpush1.bf16.msra.mxu0 %v633
        %644 = vmatprep.subr.bf16.mxu0 0
        %645 = vmatpush1.bf16.msra.mxu0 0
        %646 = vmatprep.subr.bf16.mxu0 0
        %647 = vmatpush1.bf16.msra.mxu0 0
        %648 = vmatprep.subr.bf16.mxu0 0
        %649 = vmatpush1.bf16.msra.mxu0 0
        %650 = vmatprep.subr.bf16.mxu0 0
        %651 = vmatpush1.bf16.msra.mxu0 0
        %652 = vmatprep.subr.bf16.mxu0 0
        %653 = vmatpush1.bf16.msra.mxu0 0
        %654 = vmatprep.subr.bf16.mxu0 0
        %655 = vmatpush1.bf16.msra.mxu0 0
        %656 = vmatprep.subr.bf16.mxu0 0
        %657 = vmatpush1.bf16.msra.mxu0 0
        %658 = vmatprep.subr.bf16.mxu0 0
        %659 = vmatpush1.bf16.msra.mxu0 0
        %660 = vmatprep.subr.bf16.mxu0 0
        %661 = vmatpush1.bf16.msra.mxu0 0
        %662 = vmatprep.subr.bf16.mxu0 0
        %663 = vmatpush1.bf16.msra.mxu0 0
        %664 = vmatprep.subr.bf16.mxu0 0
        %665 = vmatpush1.bf16.msra.mxu0 0
        %666 = vmatprep.subr.bf16.mxu0 0
        %667 = vmatpush1.bf16.msra.mxu0 0
        %668 = vmatprep.subr.bf16.mxu0 0
        %669 = vmatpush1.bf16.msra.mxu0 0
        %670 = vmatprep.subr.bf16.mxu0 0
        %671 = vmatpush1.bf16.msra.mxu0 0
        %672 = vmatprep.mubr.bf16.mxu0 0
        %673 = vmatmul.mubr.bf16.gmra.mrb[0].mxu0 %v638
        %v674 = vpop.f32.mrb[0].mxu0
        %v675 = vadd.f32 %v276, %v674
        %v676 = vpop.f32.mrb[0].mxu0
        %v677 = vadd.f32 %v277, %v676
        %v678 = vpop.f32.mrb[0].mxu0
        %v679 = vpop.f32.mrb[0].mxu0
        %680 = vdwg.mxu0
        %681 = vmatprep.subr.bf16.mxu0 0
        %682 = vmatpush1.bf16.msra.mxu0 %v632
        %683 = vmatprep.subr.bf16.mxu0 0
        %684 = vmatpush1.bf16.msra.mxu0 %v635
        %685 = vmatprep.subr.bf16.mxu0 0
        %686 = vmatpush1.bf16.msra.mxu0 0
        %687 = vmatprep.subr.bf16.mxu0 0
        %688 = vmatpush1.bf16.msra.mxu0 0
        %689 = vmatprep.subr.bf16.mxu0 0
        %690 = vmatpush1.bf16.msra.mxu0 0
        %691 = vmatprep.subr.bf16.mxu0 0
        %692 = vmatpush1.bf16.msra.mxu0 0
        %693 = vmatprep.subr.bf16.mxu0 0
        %694 = vmatpush1.bf16.msra.mxu0 0
        %695 = vmatprep.subr.bf16.mxu0 0
        %696 = vmatpush1.bf16.msra.mxu0 0
        %697 = vmatprep.subr.bf16.mxu0 0
        %698 = vmatpush1.bf16.msra.mxu0 0
        %699 = vmatprep.subr.bf16.mxu0 0
        %700 = vmatpush1.bf16.msra.mxu0 0
        %701 = vmatprep.subr.bf16.mxu0 0
        %702 = vmatpush1.bf16.msra.mxu0 0
        %703 = vmatprep.subr.bf16.mxu0 0
        %704 = vmatpush1.bf16.msra.mxu0 0
        %705 = vmatprep.subr.bf16.mxu0 0
        %706 = vmatpush1.bf16.msra.mxu0 0
        %707 = vmatprep.subr.bf16.mxu0 0
        %708 = vmatpush1.bf16.msra.mxu0 0
        %709 = vmatprep.subr.bf16.mxu0 0
        %710 = vmatpush1.bf16.msra.mxu0 0
        %711 = vmatprep.subr.bf16.mxu0 0
        %712 = vmatpush1.bf16.msra.mxu0 0
        %713 = vmatprep.mubr.bf16.mxu0 0
        %714 = vmatmul.mubr.bf16.gmra.mrb[0].mxu0 %v638
        %v715 = vpop.f32.mrb[0].mxu0
        %v716 = vadd.f32 %v278, %v715
        %v717 = vpop.f32.mrb[0].mxu0
        %v718 = vpop.f32.mrb[0].mxu0
        %v719 = vpop.f32.mrb[0].mxu0
        %720 = vdwg.mxu0
        %vm721 = vcmask 1040384
        %v722 = vsel %vm721, %v675, -inf
        %v723 = vsel %vm721, %v677, -inf
        %vm724 = vcmask 253952
        %v725 = vsel %vm724, %v716, -inf
        %v726 = vmax.f32 %v722, %v723
        %v727 = vmax.f32 %v726, %v725
        %728 = vmax.xlane.f32.xlu0 %v727
        %v729 = vpop.xlane.xlu0 %728
        %v730 = vsub.f32 %v675, %v729
        %v731 = vsub.f32 %v677, %v729
        %v732 = vsub.f32 %v716, %v729
        %v733 = vmul.f32 %v730, 1.442695
        %v734 = vpow.pop %v733
        %v735 = vmul.f32 %v731, 1.442695
        %v736 = vpow.pop %v735
        %v737 = vmul.f32 %v732, 1.442695
        %v738 = vpow.pop %v737
        %v739 = vsel %vm721, %v734, 0.0
        %v740 = vsel %vm721, %v736, 0.0
        %v741 = vadd.f32 %v739, %v740
        %v742 = vsel %vm724, %v738, 0.0
        %v743 = vadd.f32 %v741, %v742
        %744 = vadd.xlane.f32.xlu0 %v743
        %v745 = vpop.xlane.xlu0 %744
        %v746 = vrcp.pop %v745
        %v747 = vmul.f32 %v734, %v746
        %v748 = vmul.f32 %v736, %v746
        %v749 = vmul.f32 %v738, %v746
        %v750 = vld [vmem:[#allocation2 + $0x18] sm:$0x33]
        %v751 = vld [vmem:[#allocation2 + $0x20] sm:$0x3]
        %v752 = vpack.c.bf16 %v747, %v747
        %v753 = vpack.c.bf16 %v748, %v748
        %v754 = vpack.c.bf16 %v749, %v749
        %v757 = vunpack.c.l.b16 %v750
        %v758 = vunpack.c.h.b16 %v750
        %v759 = vunpack.c.l.b16 %v751
        %v760 = vpack.c.b16 %v757, %v757
        %v761 = vpack.c.b16 %v758, %v758
        %v762 = vpack.c.b16 %v759, %v759
        %v766 = vsel %vm636, %v754, 0
        %v769 = vsel %vm636, %v762, 0
        %771 = vmatprep.subr.bf16.mxu0 %v761
        %772 = vmatpush1.bf16.xpose.msra.mxu0 %v760
        %773 = vmatprep.subr.bf16.mxu0 0
        %774 = vmatpush1.bf16.xpose.msra.mxu0 0
        %775 = vmatprep.subr.bf16.mxu0 0
        %776 = vmatpush1.bf16.xpose.msra.mxu0 0
        %777 = vmatprep.subr.bf16.mxu0 0
        %778 = vmatpush1.bf16.xpose.msra.mxu0 0
        %779 = vmatprep.subr.bf16.mxu0 0
        %780 = vmatpush1.bf16.xpose.msra.mxu0 0
        %781 = vmatprep.subr.bf16.mxu0 0
        %782 = vmatpush1.bf16.xpose.msra.mxu0 0
        %783 = vmatprep.subr.bf16.mxu0 0
        %784 = vmatpush1.bf16.xpose.msra.mxu0 0
        %785 = vmatprep.subr.bf16.mxu0 0
        %786 = vmatpush1.bf16.xpose.msra.mxu0 0
        %787 = vmatprep.subr.bf16.mxu0 0
        %788 = vmatpush1.bf16.xpose.msra.mxu0 0
        %789 = vmatprep.subr.bf16.mxu0 0
        %790 = vmatpush1.bf16.xpose.msra.mxu0 0
        %791 = vmatprep.subr.bf16.mxu0 0
        %792 = vmatpush1.bf16.xpose.msra.mxu0 0
        %793 = vmatprep.subr.bf16.mxu0 0
        %794 = vmatpush1.bf16.xpose.msra.mxu0 0
        %795 = vmatprep.subr.bf16.mxu0 0
        %796 = vmatpush1.bf16.xpose.msra.mxu0 0
        %797 = vmatprep.subr.bf16.mxu0 0
        %798 = vmatpush1.bf16.xpose.msra.mxu0 0
        %799 = vmatprep.subr.bf16.mxu0 0
        %800 = vmatpush1.bf16.xpose.msra.mxu0 0
        %801 = vmatprep.subr.bf16.mxu0 0
        %802 = vmatpush1.bf16.xpose.msra.mxu0 0
        %803 = vmatprep.mubr.bf16.mxu0 %v753
        %804 = vmatmul.mubr.bf16.gmra.mrb[0].mxu0 %v752
        %v805 = vpop.f32.mrb[0].mxu0
        %v806 = vadd.f32 0.0, %v805
        %v807 = vpop.f32.mrb[0].mxu0
        %v808 = vpop.f32.mrb[0].mxu0
        %v809 = vpop.f32.mrb[0].mxu0
        %810 = vdwg.mxu0
        %811 = vmatprep.subr.bf16.mxu0 0
        %812 = vmatpush1.bf16.xpose.msra.mxu0 %v769
        %813 = vmatprep.subr.bf16.mxu0 0
        %814 = vmatpush1.bf16.xpose.msra.mxu0 0
        %815 = vmatprep.subr.bf16.mxu0 0
        %816 = vmatpush1.bf16.xpose.msra.mxu0 0
        %817 = vmatprep.subr.bf16.mxu0 0
        %818 = vmatpush1.bf16.xpose.msra.mxu0 0
        %819 = vmatprep.subr.bf16.mxu0 0
        %820 = vmatpush1.bf16.xpose.msra.mxu0 0
        %821 = vmatprep.subr.bf16.mxu0 0
        %822 = vmatpush1.bf16.xpose.msra.mxu0 0
        %823 = vmatprep.subr.bf16.mxu0 0
        %824 = vmatpush1.bf16.xpose.msra.mxu0 0
        %825 = vmatprep.subr.bf16.mxu0 0
        %826 = vmatpush1.bf16.xpose.msra.mxu0 0
        %827 = vmatprep.subr.bf16.mxu0 0
        %828 = vmatpush1.bf16.xpose.msra.mxu0 0
        %829 = vmatprep.subr.bf16.mxu0 0
        %830 = vmatpush1.bf16.xpose.msra.mxu0 0
        %831 = vmatprep.subr.bf16.mxu0 0
        %832 = vmatpush1.bf16.xpose.msra.mxu0 0
        %833 = vmatprep.subr.bf16.mxu0 0
        %834 = vmatpush1.bf16.xpose.msra.mxu0 0
        %835 = vmatprep.subr.bf16.mxu0 0
        %836 = vmatpush1.bf16.xpose.msra.mxu0 0
        %837 = vmatprep.subr.bf16.mxu0 0
        %838 = vmatpush1.bf16.xpose.msra.mxu0 0
        %839 = vmatprep.subr.bf16.mxu0 0
        %840 = vmatpush1.bf16.xpose.msra.mxu0 0
        %841 = vmatprep.subr.bf16.mxu0 0
        %842 = vmatpush1.bf16.xpose.msra.mxu0 0
        %843 = vmatprep.mubr.bf16.mxu0 0
        %844 = vmatmul.mubr.bf16.gmra.mrb[0].mxu0 %v766
        %v845 = vpop.f32.mrb[0].mxu0
        %v846 = vadd.f32 %v806, %v845
        %v847 = vpop.f32.mrb[0].mxu0
        %v848 = vpop.f32.mrb[0].mxu0
        %v849 = vpop.f32.mrb[0].mxu0
        %850 = vdwg.mxu0
        %vm851 = vcmask 24576
        %852 = vst.msk [vmem:[%s204] sm:$0x1] %vm851, %v846
        %s853 = sand.u32 %s120, 1
        %s854 = scalar_lea.sflag [#allocation4], %s853
        %s855 = sand.u32 %s120, 1
        %s856 = scalar_lea.vmem [#allocation3], %s855
        // Predicated region
        $region37: #{tpu_custom_call.1} parent=35 // pred_check
          %p857 = pneg %p130
        $region38: #{tpu_custom_call.1} parent=35 // pred_check_branch
          %859 = sbr.rel (%p857) target = $region40
        $region39: #{tpu_custom_call.1} parent=35 // pred_region
          %s861 = ssub.s32 16, 16
          %862 = vsyncadd %s854, %s861
          %s863 = smul.addr %s18, 16
          %s864 = scalar_lea.hbm %s4, %s863
          %s866 = sshll.u32 %s856, 4
          %s867 = int_to_ptr.vmem [resolvable:$true] %s866
          %869 = dma.vmem_to_hbm [thread:$0]  %s867, 16, %s864, %s854
        $region40: #{tpu_custom_call.1} parent=35 // pred_fallthru
          _
      $region36: #{tpu_custom_call.1} parent=5 // pred_fallthru
        _
      %p870 = scmp.le.s32.totalorder 2, %s13
      // Predicated region
      $region41: #{tpu_custom_call.1} parent=5 // pred_check
        %p871 = pneg %p870
      $region42: #{tpu_custom_call.1} parent=5 // pred_check_branch
        %873 = sbr.rel (%p871) target = $region44
      $region43: #{tpu_custom_call.1} parent=5 // pred_region
        %s874 = ssub.s32 %s13, 2
        // Predicated region
        $region45: #{tpu_custom_call.1} parent=43 // pred_check
          %p875 = pneg %p136
        $region46: #{tpu_custom_call.1} parent=43 // pred_check_branch
          %877 = sbr.rel (%p875) target = $region48
        $region47: #{tpu_custom_call.1} parent=43 // pred_region
          %s878 = sand.u32 %s121, 1
          %s879 = scalar_lea.sflag [#allocation4], %s878
          %s880 = sand.u32 %s121, 1
          %s881 = scalar_lea.vmem [#allocation3], %s880
          %882 = dma.done %s879, 16
        $region48: #{tpu_custom_call.1} parent=43 // pred_fallthru
          _
      $region44: #{tpu_custom_call.1} parent=5 // pred_fallthru
        _
    $region6: #{tpu_custom_call.1} parent=1 // loop_footer
      %s17 = sadd.s32 1, %s13
    $region7: #{tpu_custom_call.1} parent=1 // loop_footer_branch
      %12 = sbr.rel target = $region3
    $region8: #{tpu_custom_call.1} parent=1 // loop_exit
      _
    %883 = vsyncpa [#allocation4], 1
    %s884 = scalar_lea.sflag [#allocation4], 1
    %885 = vsyncpa %s884, 1

</llo_original>
